<compile_context>
chip_gen: v5e
topology: v5e:2x2
jax: 0.10.0
libtpu: 0.0.40
codegen_flags: <defaults>
</compile_context>

<pallas_src>
import functools

import jax
import jax.numpy as jnp
from jax import lax
from jax.experimental import pallas as pl
from jax.experimental.pallas import tpu as pltpu


def _round_up(x, m):
    return ((x + m - 1) // m) * m


def _vmem_capacity_bytes():
    try:
        return int(pltpu.get_tpu_info().vmem_capacity_bytes)
    except Exception:
        return 64 * 1024 * 1024  # v7x floor (v5e/v6e have 128 MiB)


# ----------------------------------------------------------------------
# In-kernel helpers
# ----------------------------------------------------------------------
def _packed_onehot(ids, *, v, p, vp, rows):
    """One-hot over packed lanes: packed row r carries p tokens; token j of
    row r lights lane j*v + ids[r, j].  (p == 1 is the plain padded case.)"""
    lane = lax.broadcasted_iota(jnp.int32, (rows, vp), 1)
    oh = jnp.zeros((rows, vp), jnp.float32)
    for j in range(p):  # p is a small static int -> unrolled VPU compares
        oh = oh + (lane == ids[:, j:j + 1] + j * v).astype(jnp.float32)
    return oh


# ----------------------------------------------------------------------
# Kernels
# ----------------------------------------------------------------------
def _logits_kernel(idx_ref, w_ref, out_ref, *, v, p, rows):
    """On-chip gather: one-hot (rows, Vp) x VMEM-resident block-diag table."""
    ids = idx_ref[...]                                   # (rows, p) int32
    vp = out_ref.shape[-1]
    oh = _packed_onehot(ids, v=v, p=p, vp=vp, rows=rows)
    out_ref[...] = jnp.dot(oh, w_ref[...], preferred_element_type=jnp.float32)


def _ce_kernel(idx_ref, tgt_ref, w_ref, out_ref, part_ref, *, v, p, rows, n_real):
    """Gather fused with cross-entropy; emits a per-tile partial NLL sum."""
    i = pl.program_id(0)
    ids = idx_ref[...]                                   # (rows, p) int32
    tgt = tgt_ref[...]                                   # (rows, p) int32
    vp = out_ref.shape[-1]
    lane = lax.broadcasted_iota(jnp.int32, (rows, vp), 1)

    oh = _packed_onehot(ids, v=v, p=p, vp=vp, rows=rows)
    logits = jnp.dot(oh, w_ref[...], preferred_element_type=jnp.float32)
    out_ref[...] = logits                                # packed, lane-dense store

    # Masked, numerically stable per-token log-sum-exp, one 32-lane (V-lane)
    # segment per packed token.
    row_id = lax.broadcasted_iota(jnp.int32, (rows, 1), 0)   # local packed row
    nll = jnp.zeros((rows, 1), jnp.float32)
    for j in range(p):                                   # static unroll (p small)
        lo = j * v
        seg = (lane >= lo) & (lane < lo + v)
        x = jnp.where(seg, logits, jnp.float32(-1e30))
        m = jnp.max(x, axis=-1, keepdims=True)           # (rows, 1)
        e = jnp.exp(x - m)                               # pad lanes underflow to 0
        lse = m + jnp.log(jnp.sum(e, axis=-1, keepdims=True))
        t1h = (lane == tgt[:, j:j + 1] + lo).astype(jnp.float32)
        tgt_logit = jnp.sum(logits * t1h, axis=-1, keepdims=True)
        tok = (i * rows + row_id) * p + j                # global token index
        nll = nll + jnp.where(tok < n_real, lse - tgt_logit, jnp.float32(0.0))

    tile_sum = jnp.sum(nll)                              # scalar partial for this tile
    lvec = lax.broadcasted_iota(jnp.int32, (1, 1, 128), 2)
    part_ref[...] = jnp.where(lvec == 0, tile_sum, jnp.float32(0.0))


# ----------------------------------------------------------------------
# Wrapper (the model)
# ----------------------------------------------------------------------
class BigramModelPallas:
    def __init__(self, vocab_size, key, *, row_tile=1024):
        self.vocab_size = int(vocab_size)
        self.row_tile = int(row_tile)          # packed rows per grid step (max)
        # nn.Embedding default init: N(0, 1)
        self.embedding = jax.random.normal(
            key, (vocab_size, vocab_size), dtype=jnp.float32
        )

        v = self.vocab_size
        self._v_pad = _round_up(max(v, 1), 128)
        # Pack P tokens per 128-lane output row when possible (P=4 for V=32):
        # cuts the logits HBM writeback by P (no pad-lane write amplification).
        self._pack = self._v_pad // v if self._v_pad % v == 0 else 1
        # Block-diagonal, P-times-replicated table (Vp x Vp, ~64 KiB for
        # Vp=128).  Lives resident in VMEM inside the kernel.
        w = jnp.zeros((self._v_pad, self._v_pad), jnp.float32)
        for j in range(self._pack):
            w = w.at[j * v:(j + 1) * v, j * v:(j + 1) * v].set(self.embedding)
        self._w_packed = w

        # Explicit VMEM budget (v7x has only 64 MiB): keep plenty of headroom.
        self._vmem_budget = min(_vmem_capacity_bytes() // 4, 32 << 20)

    # Pick the packed-row tile from the VMEM budget (multiple of 8).
    def _pick_rows(self, rows_total):
        per_row = 6 * self._v_pad * 4        # out double-buffer + compute vregs
        r_cap = max(8, (self._vmem_budget // per_row) // 8 * 8)
        r = min(self.row_tile, r_cap, _round_up(max(rows_total, 1), 8))
        return max(8, (r // 8) * 8)

    def _unpack(self, packed, n):
        v, p = self.vocab_size, self._pack
        if p > 1:
            return packed.reshape(packed.shape[0] * p, v)[:n]
        return packed[:n, :v]

    def forward(self, idx, targets=None):
        B, T = idx.shape
        N = B * T
        V = self.vocab_size
        Vp = self._v_pad
        P = self._pack

        rows_total = pl.cdiv(N, P)
        R = self._pick_rows(rows_total)
        rows_pad = _round_up(rows_total, R)
        grid = (rows_pad // R,)
        n_tok_pad = rows_pad * P

        idx_flat = idx.reshape(N).astype(jnp.int32)
        if n_tok_pad > N:
            idx_flat = jnp.pad(idx_flat, (0, n_tok_pad - N))
        idx_pk = idx_flat.reshape(rows_pad, P)

        # Scoped-VMEM limit: table dbuf + out dbuf + idx/tgt dbuf, with slack.
        need = 2 * Vp * Vp * 4 + 2 * R * Vp * 4 + 4 * R * P * 4 + 2 * 128 * 4
        vmem_limit = int(min(48 << 20, max(2 * need + (4 << 20), 16 << 20)))

        w_spec = pl.BlockSpec((Vp, Vp), lambda i: (0, 0))      # resident table
        idx_spec = pl.BlockSpec((R, P), lambda i: (i, 0))
        out_spec = pl.BlockSpec((R, Vp), lambda i: (i, 0))
        cparams = pltpu.CompilerParams(
            dimension_semantics=("parallel",),                 # v7x megacore-friendly
            vmem_limit_bytes=vmem_limit,
        )

        if targets is None:
            kern = functools.partial(_logits_kernel, v=V, p=P, rows=R)
            packed = pl.pallas_call(
                kern,
                out_shape=jax.ShapeDtypeStruct((rows_pad, Vp), jnp.float32),
                grid=grid,
                in_specs=[idx_spec, w_spec],
                out_specs=out_spec,
                compiler_params=cparams,
            )(idx_pk, self._w_packed)
            logits = self._unpack(packed, N).reshape(B, T, V)
            return logits, None

        tgt_flat = targets.reshape(N).astype(jnp.int32)
        if n_tok_pad > N:
            tgt_flat = jnp.pad(tgt_flat, (0, n_tok_pad - N))
        tgt_pk = tgt_flat.reshape(rows_pad, P)

        kern = functools.partial(_ce_kernel, v=V, p=P, rows=R, n_real=N)
        packed, partials = pl.pallas_call(
            kern,
            out_shape=(
                jax.ShapeDtypeStruct((rows_pad, Vp), jnp.float32),
                jax.ShapeDtypeStruct((grid[0], 1, 128), jnp.float32),
            ),
            grid=grid,
            in_specs=[idx_spec, idx_spec, w_spec],
            out_specs=(out_spec, pl.BlockSpec((1, 1, 128), lambda i: (i, 0, 0))),
            compiler_params=cparams,
        )(idx_pk, tgt_pk, self._w_packed)

        loss = jnp.sum(partials) / jnp.float32(N)              # global mean
        # NB: the PyTorch module returns the flattened (B*T, V) view when
        # targets are given; we match that.
        return self._unpack(packed, N), loss

    # TODO(synk): generate() (autoregressive torch.multinomial sampling loop)
    # is host-side control flow, not implemented as a kernel.


# ----------------------------------------------------------------------
# Reference (pure JAX) for correctness checks
# ----------------------------------------------------------------------
def _reference(emb, idx, targets):
    logits = emb[idx]                                # (B, T, V)
    B, T, V = logits.shape
    lf = logits.reshape(B * T, V)
    tf = targets.reshape(B * T)
    lse = jax.scipy.special.logsumexp(lf, axis=-1)
    nll = lse - lf[jnp.arange(B * T), tf]
    return lf, jnp.mean(nll)


def _check(model, idx, targets):
    B, T = idx.shape
    V = model.vocab_size

    logits_only, loss_none = model.forward(idx, None)
    jax.block_until_ready(logits_only)
    assert loss_none is None
    assert logits_only.shape == (B, T, V)

    logits, loss = model.forward(idx, targets)
    jax.block_until_ready((logits, loss))

    ref_logits, ref_loss = _reference(model.embedding, idx, targets)
    assert logits.shape == (B * T, V)
    assert jnp.allclose(logits, ref_logits, atol=1e-5, rtol=1e-5)
    assert jnp.allclose(loss, ref_loss, atol=1e-5, rtol=1e-5)
    assert jnp.allclose(logits_only.reshape(B * T, V), ref_logits,
                        atol=1e-5, rtol=1e-5)


if __name__ == "__main__":
    key = jax.random.PRNGKey(0)

    # Primary config (matches the module spec at small shapes): V=32, B=2, T=8.
    k_emb, k_idx, k_tgt, key = jax.random.split(key, 4)
    vocab_size, B, T = 32, 2, 8
    model = BigramModelPallas(vocab_size, k_emb)
    idx = jax.random.randint(k_idx, (B, T), 0, vocab_size, dtype=jnp.int32)
    tgt = jax.random.randint(k_tgt, (B, T), 0, vocab_size, dtype=jnp.int32)
    _check(model, idx, tgt)

    # Secondary config: packed path (P=4), multi-tile grid, padded rows.
    k_emb, k_idx, k_tgt, key = jax.random.split(key, 4)
    vocab_size, B, T = 32, 3, 50
    model2 = BigramModelPallas(vocab_size, k_emb, row_tile=8)
    idx = jax.random.randint(k_idx, (B, T), 0, vocab_size, dtype=jnp.int32)
    tgt = jax.random.randint(k_tgt, (B, T), 0, vocab_size, dtype=jnp.int32)
    _check(model2, idx, tgt)

    # Tertiary config: non-divisible vocab (P=1, lane-padded fallback).
    k_emb, k_idx, k_tgt, key = jax.random.split(key, 4)
    vocab_size, B, T = 65, 2, 37
    model3 = BigramModelPallas(vocab_size, k_emb, row_tile=8)
    idx = jax.random.randint(k_idx, (B, T), 0, vocab_size, dtype=jnp.int32)
    tgt = jax.random.randint(k_tgt, (B, T), 0, vocab_size, dtype=jnp.int32)
    _check(model3, idx, tgt)

    print("KERNEL_OK")
</pallas_src>

<mosaic_0001>
module attributes {stable_mosaic.version = 11 : i64} {
  func.func @_logits_kernel(%arg0: i32, %arg1: memref<8x4xi32, #tpu.memory_space<vmem>>, %arg2: memref<128x128xf32, #tpu.memory_space<vmem>>, %arg3: memref<8x128xf32, #tpu.memory_space<vmem>>) attributes {dimension_semantics = [#tpu.dimension_semantics<parallel>], iteration_bounds = array<i64: 1>, scalar_prefetch = 0 : i64, scratch_operands = 0 : i64, tpu.core_type = #tpu.core_type<tc>, window_params = [{transform_indices = @transform_0, window_bounds = array<i64: 8, 4>}, {pipeline_mode = #tpu.pipeline_mode<synchronous>, transform_indices = @transform_1, window_bounds = array<i64: 128, 128>}, {transform_indices = @transform_2, window_bounds = array<i64: 8, 128>}]} {
    %c0 = arith.constant 0 : index
    %c0_0 = arith.constant 0 : index
    %0 = vector.load %arg1[%c0, %c0_0] : memref<8x4xi32, #tpu.memory_space<vmem>>, vector<8x4xi32>
    %1 = tpu.iota {dimensions = array<i32: 1>} : vector<8x128xi32>
    %cst = arith.constant 0.000000e+00 : f32
    %2 = vector.broadcast %cst : f32 to vector<8x128xf32>
    %3 = vector.extract_strided_slice %0 {offsets = [0, 0], sizes = [8, 1], strides = [1, 1]} : vector<8x4xi32> to vector<8x1xi32>
    %c0_i32 = arith.constant 0 : i32
    %4 = vector.broadcast %c0_i32 : i32 to vector<8x1xi32>
    %5 = arith.addi %3, %4 : vector<8x1xi32>
    %6 = vector.broadcast %5 : vector<8x1xi32> to vector<8x128xi32>
    %7 = arith.cmpi eq, %1, %6 : vector<8x128xi32>
    %8 = arith.extui %7 : vector<8x128xi1> to vector<8x128xi32>
    %9 = arith.sitofp %8 : vector<8x128xi32> to vector<8x128xf32>
    %10 = arith.addf %2, %9 : vector<8x128xf32>
    %11 = vector.extract_strided_slice %0 {offsets = [0, 1], sizes = [8, 1], strides = [1, 1]} : vector<8x4xi32> to vector<8x1xi32>
    %c32_i32 = arith.constant 32 : i32
    %12 = vector.broadcast %c32_i32 : i32 to vector<8x1xi32>
    %13 = arith.addi %11, %12 : vector<8x1xi32>
    %14 = vector.broadcast %13 : vector<8x1xi32> to vector<8x128xi32>
    %15 = arith.cmpi eq, %1, %14 : vector<8x128xi32>
    %16 = arith.extui %15 : vector<8x128xi1> to vector<8x128xi32>
    %17 = arith.sitofp %16 : vector<8x128xi32> to vector<8x128xf32>
    %18 = arith.addf %10, %17 : vector<8x128xf32>
    %19 = vector.extract_strided_slice %0 {offsets = [0, 2], sizes = [8, 1], strides = [1, 1]} : vector<8x4xi32> to vector<8x1xi32>
    %c64_i32 = arith.constant 64 : i32
    %20 = vector.broadcast %c64_i32 : i32 to vector<8x1xi32>
    %21 = arith.addi %19, %20 : vector<8x1xi32>
    %22 = vector.broadcast %21 : vector<8x1xi32> to vector<8x128xi32>
    %23 = arith.cmpi eq, %1, %22 : vector<8x128xi32>
    %24 = arith.extui %23 : vector<8x128xi1> to vector<8x128xi32>
    %25 = arith.sitofp %24 : vector<8x128xi32> to vector<8x128xf32>
    %26 = arith.addf %18, %25 : vector<8x128xf32>
    %27 = vector.extract_strided_slice %0 {offsets = [0, 3], sizes = [8, 1], strides = [1, 1]} : vector<8x4xi32> to vector<8x1xi32>
    %c96_i32 = arith.constant 96 : i32
    %28 = vector.broadcast %c96_i32 : i32 to vector<8x1xi32>
    %29 = arith.addi %27, %28 : vector<8x1xi32>
    %30 = vector.broadcast %29 : vector<8x1xi32> to vector<8x128xi32>
    %31 = arith.cmpi eq, %1, %30 : vector<8x128xi32>
    %32 = arith.extui %31 : vector<8x128xi1> to vector<8x128xi32>
    %33 = arith.sitofp %32 : vector<8x128xi32> to vector<8x128xf32>
    %34 = arith.addf %26, %33 : vector<8x128xf32>
    %c0_1 = arith.constant 0 : index
    %c0_2 = arith.constant 0 : index
    %35 = vector.load %arg2[%c0_1, %c0_2] : memref<128x128xf32, #tpu.memory_space<vmem>>, vector<128x128xf32>
    %cst_3 = arith.constant dense<0.000000e+00> : vector<8x128xf32>
    %36 = tpu.matmul %34, %35, %cst_3 {dimension_numbers = #tpu.dot_dimension_numbers<[1], [0], [0], [1], [0, 0, 1, 1], [], []>} : vector<8x128xf32>, vector<128x128xf32>, vector<8x128xf32> -> vector<8x128xf32>
    %c0_4 = arith.constant 0 : index
    %c0_5 = arith.constant 0 : index
    %37 = vector.load %arg3[%c0_4, %c0_5] : memref<8x128xf32, #tpu.memory_space<vmem>>, vector<8x128xf32>
    tpu.vector_store %arg3[%c0_4, %c0_5], %36 {strides = array<i32>} : memref<8x128xf32, #tpu.memory_space<vmem>>, vector<8x128xf32>,
    return
  }
  func.func @transform_0(%arg0: i32) -> (i32, i32) {
    %c0_i32 = arith.constant 0 : i32
    %c0_i32_0 = arith.constant 0 : i32
    return %arg0, %c0_i32 : i32, i32
  }
  func.func @transform_1(%arg0: i32) -> (i32, i32) {
    %c0_i32 = arith.constant 0 : i32
    %c0_i32_0 = arith.constant 0 : i32
    %c0_i32_1 = arith.constant 0 : i32
    return %c0_i32, %c0_i32_0 : i32, i32
  }
  func.func @transform_2(%arg0: i32) -> (i32, i32) {
    %c0_i32 = arith.constant 0 : i32
    %c0_i32_0 = arith.constant 0 : i32
    return %arg0, %c0_i32 : i32, i32
  }
}

</mosaic_0001>

<llo_original>
// kernel: tpu_custom_call.1
$region0: #{tpu_custom_call.1}
  #allocation0 [shape = 'u32[]', space=smem, size = 0x4, offset = 0x4, fixed_abs, tag = 'smem constant byte address 0x4 - core index']
  #allocation1 [shape = 'u32[72,128]{1,0:T(1,128)}', space=vmem, size = 0x9000, scoped, tag = 'internal scratch']
  %s0 = inlined_call_operand.vmem [shape: s32[8,4], index: 0, kind: input, shape index: {}]
  %s1 = inlined_call_operand.hbm [shape: f32[128,128], index: 1, kind: input, shape index: {}]
  %s2 = inlined_call_operand.hbm [shape: f32[8,128], index: 2, kind: output, shape index: {}]
  %s3 = sld [smem:[#allocation0]]
  $region22: #{tpu_custom_call.1} parent=0
    _
  %s5 = ssub.s32 1, %s3
  %s6 = scalar_select 0, %s5, %s3
  $region1: #{tpu_custom_call.1} parent=0
    #allocation2 [shape = 'u8[65536]{0}', space=vmem, size = 0x10000, scoped, tag = 'input window, operand 1, single buffered']
    #allocation3 [shape = 's32[1]{0}', space=sflag, size = 0x4, scoped, tag = 'scoped memory for tpu_custom_call.1']
    #allocation4 [shape = 's32[1]{0}', space=sflag, size = 0x4, scoped, tag = 'scoped memory for tpu_custom_call.1']
    #allocation5 [shape = 'u8[4096]{0}', space=vmem, size = 0x1000, scoped, tag = 'output window, operand 0, single buffered']
    %7 = vsyncpa [#allocation3], 0
    %8 = vsyncpa [#allocation4], 0
    // Predicated region
    $region2: #{tpu_custom_call.1} parent=1 // pred_check
      _
    $region3: #{tpu_custom_call.1} parent=1 // pred_check_branch
      %10 = sbr.rel (0) target = $region5
    $region4: #{tpu_custom_call.1} parent=1 // pred_region
      _
    $region5: #{tpu_custom_call.1} parent=1 // pred_fallthru
      _
    // Predicated region
    $region6: #{tpu_custom_call.1} parent=1 // pred_check
      _
    $region7: #{tpu_custom_call.1} parent=1 // pred_check_branch
      %12 = sbr.rel (0) target = $region9
    $region8: #{tpu_custom_call.1} parent=1 // pred_region
      %14 = vsyncadd [#allocation3], 0
      %s15 = sshll.u32 %s1, 4
      %s16 = int_to_ptr.hbm [resolvable:$true] %s15
      %s17 = sshll.u32 [#allocation2], 4
      %s18 = int_to_ptr.vmem [resolvable:$true] %s17
      %23 = dma.hbm_to_vmem [thread:$0]  %s16, 2048, %s18, [#allocation3], 128, 128, 8
    $region9: #{tpu_custom_call.1} parent=1 // pred_fallthru
      _
    // Predicated region
    $region10: #{tpu_custom_call.1} parent=1 // pred_check
      _
    $region11: #{tpu_custom_call.1} parent=1 // pred_check_branch
      %25 = sbr.rel (0) target = $region13
    $region12: #{tpu_custom_call.1} parent=1 // pred_region
      %27 = dma.done [#allocation3], 2048
    $region13: #{tpu_custom_call.1} parent=1 // pred_fallthru
      _
    %v28 = vld [vmem:[%s0] sm:$0xff]
    %v29 = vlaneseq
    %v30 = vand.u32 %v29, 127
    %31 = vset.pattern.permute.xlu0 0
    %32 = vperm.xlu0 %31, %v28
    %v33 = vpop.permute.xlu0 %32
    %vm34 = vcmp.eq.s32.totalorder %v30, %v33
    %v35 = vsel %vm34, 1, 0
    %v36 = vcvt.s32.f32 %v35
    %v37 = vadd.f32 %v36, 0.0
    %v38 = vadd.s32 %v28, 32
    %39 = vset.pattern.permute.xlu0 1
    %40 = vperm.xlu0 %39, %v38
    %v41 = vpop.permute.xlu0 %40
    %vm42 = vcmp.eq.s32.totalorder %v30, %v41
    %v43 = vsel %vm42, 1, 0
    %v44 = vcvt.s32.f32 %v43
    %v45 = vadd.f32 %v37, %v44
    %v46 = vadd.s32 %v28, 64
    %47 = vset.pattern.permute.xlu0 2
    %48 = vperm.xlu0 %47, %v46
    %v49 = vpop.permute.xlu0 %48
    %vm50 = vcmp.eq.s32.totalorder %v30, %v49
    %v51 = vsel %vm50, 1, 0
    %v52 = vcvt.s32.f32 %v51
    %v53 = vadd.f32 %v45, %v52
    %v54 = vadd.s32 %v28, 96
    %55 = vset.pattern.permute.xlu0 3
    %56 = vperm.xlu0 %55, %v54
    %v57 = vpop.permute.xlu0 %56
    %vm58 = vcmp.eq.s32.totalorder %v30, %v57
    %v59 = vsel %vm58, 1, 0
    %v60 = vcvt.s32.f32 %v59
    %v61 = vadd.f32 %v53, %v60
    %v62 = vld [vmem:[#allocation2] sm:$0xff]
    %v63 = vld [vmem:[#allocation2 + $0x8] sm:$0xff]
    %v64 = vld [vmem:[#allocation2 + $0x10] sm:$0xff]
    %v65 = vld [vmem:[#allocation2 + $0x18] sm:$0xff]
    %v66 = vld [vmem:[#allocation2 + $0x20] sm:$0xff]
    %v67 = vld [vmem:[#allocation2 + $0x28] sm:$0xff]
    %v68 = vld [vmem:[#allocation2 + $0x30] sm:$0xff]
    %v69 = vld [vmem:[#allocation2 + $0x38] sm:$0xff]
    %v70 = vld [vmem:[#allocation2 + $0x40] sm:$0xff]
    %v71 = vld [vmem:[#allocation2 + $0x48] sm:$0xff]
    %v72 = vld [vmem:[#allocation2 + $0x50] sm:$0xff]
    %v73 = vld [vmem:[#allocation2 + $0x58] sm:$0xff]
    %v74 = vld [vmem:[#allocation2 + $0x60] sm:$0xff]
    %v75 = vld [vmem:[#allocation2 + $0x68] sm:$0xff]
    %v76 = vld [vmem:[#allocation2 + $0x70] sm:$0xff]
    %v77 = vld [vmem:[#allocation2 + $0x78] sm:$0xff]
    %78 = vmatpush.msra.mxu0 %v77
    %79 = vmatpush.msra.mxu0 %v76
    %80 = vmatpush.msra.mxu0 %v75
    %81 = vmatpush.msra.mxu0 %v74
    %82 = vmatpush.msra.mxu0 %v73
    %83 = vmatpush.msra.mxu0 %v72
    %84 = vmatpush.msra.mxu0 %v71
    %85 = vmatpush.msra.mxu0 %v70
    %86 = vmatpush.msra.mxu0 %v69
    %87 = vmatpush.msra.mxu0 %v68
    %88 = vmatpush.msra.mxu0 %v67
    %89 = vmatpush.msra.mxu0 %v66
    %90 = vmatpush.msra.mxu0 %v65
    %91 = vmatpush.msra.mxu0 %v64
    %92 = vmatpush.msra.mxu0 %v63
    %93 = vmatpush.msra.mxu0 %v62
    %94 = vmatmul.f32.gmra.mxu0 %v61
    %v95 = vpop.f32.mrf.mxu0
    %v96 = vadd.f32 0.0, %v95
    %97 = vdwg.mxu0
    %98 = vst [vmem:[#allocation5] sm:$0xff] %v96
    // Predicated region
    $region14: #{tpu_custom_call.1} parent=1 // pred_check
      _
    $region15: #{tpu_custom_call.1} parent=1 // pred_check_branch
      %100 = sbr.rel (0) target = $region17
    $region16: #{tpu_custom_call.1} parent=1 // pred_region
      %102 = vsyncadd [#allocation4], 0
      %s104 = sshll.u32 [#allocation5], 4
      %s105 = int_to_ptr.vmem [resolvable:$true] %s104
      %s106 = sshll.u32 %s2, 4
      %s107 = int_to_ptr.hbm [resolvable:$true] %s106
      %109 = dma.vmem_to_hbm [thread:$0]  %s105, 128, %s107, [#allocation4]
    $region17: #{tpu_custom_call.1} parent=1 // pred_fallthru
      _
    // Predicated region
    $region18: #{tpu_custom_call.1} parent=1 // pred_check
      _
    $region19: #{tpu_custom_call.1} parent=1 // pred_check_branch
      %111 = sbr.rel (0) target = $region21
    $region20: #{tpu_custom_call.1} parent=1 // pred_region
      %113 = dma.done [#allocation4], 128
    $region21: #{tpu_custom_call.1} parent=1 // pred_fallthru
      _
    %114 = vsyncpa [#allocation3], 1
    %115 = vsyncpa [#allocation4], 1

</llo_original>
